<compile_context>
chip_gen: v5e
topology: v5e:2x2
jax: 0.10.0
libtpu: 0.0.40
codegen_flags: <defaults>
</compile_context>

<pallas_src>
import math
import functools

import numpy as np
import jax
import jax.numpy as jnp
from jax import lax
from jax.experimental import pallas as pl
from jax.experimental.pallas import tpu as pltpu


def attention_kernel(x_ref, wqkv_ref, wo_ref, vec_ref, out_ref,
                     *, batch, seq, num_heads, head_dim, eps):
    D = num_heads * head_dim
    x = x_ref[...]                                    # (B*S, D) f32 residual input

    vec = vec_ref[...]                                # (4, 128) f32 packed vectors
    b_qkv = vec[0:1, 0:3 * D]                         # (1, 3D)  fused q|k|v bias
    b_o = vec[1:2, 0:D]                               # (1, D)   output-dense bias
    gamma = vec[2:3, 0:D]                             # (1, D)   LayerNorm gamma
    beta = vec[3:4, 0:D]                              # (1, D)   LayerNorm beta

    # ---- fused Q/K/V projection over all B*S rows: one MXU push ------------
    # 1/sqrt(head_dim) is already folded into the q columns of wqkv / b_qkv.
    qkv = jnp.dot(x.astype(jnp.bfloat16), wqkv_ref[...],
                  preferred_element_type=jnp.float32) + b_qkv      # (B*S, 3D) f32

    q_bf = qkv[:, 0 * D:1 * D].astype(jnp.bfloat16)
    k_bf = qkv[:, 1 * D:2 * D].astype(jnp.bfloat16)
    v_bf = qkv[:, 2 * D:3 * D].astype(jnp.bfloat16)

    wo = wo_ref[...]                                  # (D, D) bf16
    # Sublane-aligned row slices of the output-projection weight (offsets
    # 0/8/16/24 -> layout-free).
    wo_h = [wo[h * head_dim:(h + 1) * head_dim, :] for h in range(num_heads)]

    # ---- per-(batch, head) attention fused with the output projection ------
    dense_blocks = []
    for b in range(batch):
        r = slice(b * seq, (b + 1) * seq)             # sublane-aligned row block
        acc_b = jnp.zeros((seq, D), jnp.float32)
        for h in range(num_heads):
            c = slice(h * head_dim, (h + 1) * head_dim)
            qh = q_bf[r, c]                           # (S, Dh) bf16
            kh = k_bf[r, c]
            vh = v_bf[r, c]
            # q @ k^T without materialising a transpose: contract last dims.
            scores = lax.dot_general(
                qh, kh, dimension_numbers=(((1,), (1,)), ((), ())),
                preferred_element_type=jnp.float32)   # (S, S) f32
            # Numerically-stable softmax in f32; reciprocal runs on the EUP.
            scores = scores - jnp.max(scores, axis=-1, keepdims=True)
            e = jnp.exp(scores)
            probs = e * pl.reciprocal(jnp.sum(e, axis=-1, keepdims=True),
                                      approx=False)
            # TODO(synk): attention-probs dropout is identity (eval mode);
            # attention_mask / head_mask / encoder_hidden_states /
            # past_key_value branches are not implemented.
            ctx = jnp.dot(probs.astype(jnp.bfloat16), vh,
                          preferred_element_type=jnp.float32)      # (S, Dh) f32
            # Accumulate this head's slice of the output projection directly
            # (no ctx VMEM scratch, no concatenate over heads).
            acc_b = acc_b + jnp.dot(ctx.astype(jnp.bfloat16), wo_h[h],
                                    preferred_element_type=jnp.float32)
        dense_blocks.append(acc_b)

    # ---- Residual block: dense -> (dropout = id) -> LayerNorm(dense + x) ---
    dense = jnp.concatenate(dense_blocks, axis=0) + b_o            # (B*S, D) f32
    h_sum = dense + x
    mean = jnp.mean(h_sum, axis=-1, keepdims=True)
    var = jnp.mean((h_sum - mean) ** 2, axis=-1, keepdims=True)
    out = (h_sum - mean) * lax.rsqrt(var + eps) * gamma + beta

    out_ref[...] = out.astype(out_ref.dtype)
    # TODO(synk): for realistic sequence lengths replace the resident (S, S)
    # score tile with a kv-blocked online-softmax (flash) loop; size q/kv
    # blocks against VMEM (64 MiB physical / 32 MiB default-scoped on v7x vs
    # 128 MiB on v5e/v6e), set vmem_limit_bytes explicitly, and prefer
    # 256-multiples on contracting/output dims for the 256x256 MXU (v6e/v7x)
    # or 128-multiples on v5e.


def attention_forward(hidden_states, params, *, num_heads, eps=1e-12):
    """hidden_states: (B, S, D) float32."""
    B, S, D = hidden_states.shape
    assert D % num_heads == 0
    head_dim = D // num_heads
    N = B * S

    scale = 1.0 / math.sqrt(head_dim)

    # Fuse Q/K/V weights (with 1/sqrt(head_dim) folded into the q columns) and
    # pre-cast matmul weights to bf16 (halves weight DMA bytes).  Biases and
    # LayerNorm params stay f32 (VPU math) and are packed into ONE lane-padded
    # (4, 128) array so the kernel has a single small-vector DMA.
    w_qkv = jnp.concatenate([params["wq"] * scale, params["wk"], params["wv"]],
                            axis=1).astype(jnp.bfloat16)            # (D, 3D) bf16
    w_o = params["wo"].astype(jnp.bfloat16)                         # (D, D)  bf16

    def lane_pad(v, width=128):
        return jnp.pad(v, ((0, 0), (0, width - v.shape[1])))

    b_qkv = jnp.concatenate([params["bq"] * scale, params["bk"], params["bv"]],
                            axis=1)                                 # (1, 3D) f32
    vecs = jnp.concatenate([lane_pad(b_qkv),
                            lane_pad(params["bo"]),
                            lane_pad(params["gamma"]),
                            lane_pad(params["beta"])], axis=0)      # (4, 128) f32

    x2d = hidden_states.reshape(N, D)

    kernel = functools.partial(attention_kernel, batch=B, seq=S,
                               num_heads=num_heads, head_dim=head_dim, eps=eps)

    out2d = pl.pallas_call(
        kernel,
        out_shape=jax.ShapeDtypeStruct((N, D), jnp.float32),
        in_specs=[
            pl.BlockSpec((N, D), lambda: (0, 0)),        # x (flattened B*S rows)
            pl.BlockSpec((D, 3 * D), lambda: (0, 0)),    # fused q|k|v weight
            pl.BlockSpec((D, D), lambda: (0, 0)),        # output-dense weight
            pl.BlockSpec((4, 128), lambda: (0, 0)),      # packed bias / LN vectors
        ],
        out_specs=pl.BlockSpec((N, D), lambda: (0, 0)),
    )(x2d, w_qkv, w_o, vecs)

    return out2d.reshape(B, S, D)


def reference_forward(x, params, *, num_heads, eps=1e-12):
    """Pure-JAX f32 reference matching the PyTorch forward (eval mode)."""
    B, S, D = x.shape
    head_dim = D // num_heads
    q = x @ params["wq"] + params["bq"]
    k = x @ params["wk"] + params["bk"]
    v = x @ params["wv"] + params["bv"]

    def split(t):  # (B,S,D) -> (B,H,S,Dh)
        return t.reshape(B, S, num_heads, head_dim).transpose(0, 2, 1, 3)

    qh, kh, vh = split(q), split(k), split(v)
    scores = jnp.einsum("bhqd,bhkd->bhqk", qh, kh) / math.sqrt(head_dim)
    probs = jax.nn.softmax(scores, axis=-1)
    ctx = jnp.einsum("bhqk,bhkd->bhqd", probs, vh)
    ctx = ctx.transpose(0, 2, 1, 3).reshape(B, S, D)
    dense = ctx @ params["wo"] + params["bo"]
    h = dense + x
    mean = jnp.mean(h, axis=-1, keepdims=True)
    var = jnp.mean((h - mean) ** 2, axis=-1, keepdims=True)
    return (h - mean) / jnp.sqrt(var + eps) * params["gamma"] + params["beta"]


if __name__ == "__main__":
    # Small config: mm_hidden_size=32, mm_num_attention_heads=4, seq=8, batch=2
    B, S, D, H = 2, 8, 32, 4
    EPS = 1e-12  # config.mm_layer_norm_eps

    key = jax.random.PRNGKey(0)
    keys = jax.random.split(key, 10)
    scale = 0.02
    params = {
        "wq": scale * jax.random.normal(keys[0], (D, D), jnp.float32),
        "bq": scale * jax.random.normal(keys[1], (1, D), jnp.float32),
        "wk": scale * jax.random.normal(keys[2], (D, D), jnp.float32),
        "bk": scale * jax.random.normal(keys[3], (1, D), jnp.float32),
        "wv": scale * jax.random.normal(keys[4], (D, D), jnp.float32),
        "bv": scale * jax.random.normal(keys[5], (1, D), jnp.float32),
        "wo": scale * jax.random.normal(keys[6], (D, D), jnp.float32),
        "bo": scale * jax.random.normal(keys[7], (1, D), jnp.float32),
        "gamma": jnp.ones((1, D), jnp.float32),
        "beta": jnp.zeros((1, D), jnp.float32),
    }
    x = jax.random.normal(keys[8], (B, S, D), jnp.float32)

    out = attention_forward(x, params, num_heads=H, eps=EPS)
    out = jax.block_until_ready(out)

    ref = reference_forward(x, params, num_heads=H, eps=EPS)
    # bf16 MXU operands + scale folded into q before the bf16 cast -> loosen
    # tolerance vs the pure-f32 reference.
    np.testing.assert_allclose(np.asarray(out), np.asarray(ref),
                               rtol=1e-2, atol=1e-2)

    print("KERNEL_OK")
</pallas_src>

<mosaic_0001>
module attributes {stable_mosaic.version = 11 : i64} {
  func.func @attention_kernel(%arg0: memref<16x32xf32, #tpu.memory_space<vmem>>, %arg1: memref<32x96xbf16, #tpu.memory_space<vmem>>, %arg2: memref<32x32xbf16, #tpu.memory_space<vmem>>, %arg3: memref<4x128xf32, #tpu.memory_space<vmem>>, %arg4: memref<16x32xf32, #tpu.memory_space<vmem>>) attributes {dimension_semantics = [], scalar_prefetch = 0 : i64, scratch_operands = 0 : i64, tpu.core_type = #tpu.core_type<tc>} {
    %c0 = arith.constant 0 : index
    %c0_0 = arith.constant 0 : index
    %0 = vector.load %arg0[%c0, %c0_0] : memref<16x32xf32, #tpu.memory_space<vmem>>, vector<16x32xf32>
    %c0_1 = arith.constant 0 : index
    %c0_2 = arith.constant 0 : index
    %1 = vector.load %arg3[%c0_1, %c0_2] : memref<4x128xf32, #tpu.memory_space<vmem>>, vector<4x128xf32>
    %2 = vector.extract_strided_slice %1 {offsets = [0, 0], sizes = [1, 96], strides = [1, 1]} : vector<4x128xf32> to vector<1x96xf32>
    %3 = vector.extract_strided_slice %1 {offsets = [1, 0], sizes = [1, 32], strides = [1, 1]} : vector<4x128xf32> to vector<1x32xf32>
    %4 = vector.extract_strided_slice %1 {offsets = [2, 0], sizes = [1, 32], strides = [1, 1]} : vector<4x128xf32> to vector<1x32xf32>
    %5 = vector.extract_strided_slice %1 {offsets = [3, 0], sizes = [1, 32], strides = [1, 1]} : vector<4x128xf32> to vector<1x32xf32>
    %6 = arith.truncf %0 : vector<16x32xf32> to vector<16x32xbf16>
    %c0_3 = arith.constant 0 : index
    %c0_4 = arith.constant 0 : index
    %7 = vector.load %arg1[%c0_3, %c0_4] : memref<32x96xbf16, #tpu.memory_space<vmem>>, vector<32x96xbf16>
    %cst = arith.constant dense<0.000000e+00> : vector<16x96xf32>
    %8 = tpu.matmul %6, %7, %cst {dimension_numbers = #tpu.dot_dimension_numbers<[1], [0], [0], [1], [0, 0, 1, 1], [], []>} : vector<16x32xbf16>, vector<32x96xbf16>, vector<16x96xf32> -> vector<16x96xf32>
    %9 = vector.broadcast %2 : vector<1x96xf32> to vector<16x96xf32>
    %10 = arith.addf %8, %9 : vector<16x96xf32>
    %11 = vector.extract_strided_slice %10 {offsets = [0, 0], sizes = [16, 32], strides = [1, 1]} : vector<16x96xf32> to vector<16x32xf32>
    %12 = arith.truncf %11 : vector<16x32xf32> to vector<16x32xbf16>
    %13 = vector.extract_strided_slice %10 {offsets = [0, 32], sizes = [16, 32], strides = [1, 1]} : vector<16x96xf32> to vector<16x32xf32>
    %14 = arith.truncf %13 : vector<16x32xf32> to vector<16x32xbf16>
    %15 = vector.extract_strided_slice %10 {offsets = [0, 64], sizes = [16, 32], strides = [1, 1]} : vector<16x96xf32> to vector<16x32xf32>
    %16 = arith.truncf %15 : vector<16x32xf32> to vector<16x32xbf16>
    %c0_5 = arith.constant 0 : index
    %c0_6 = arith.constant 0 : index
    %17 = vector.load %arg2[%c0_5, %c0_6] : memref<32x32xbf16, #tpu.memory_space<vmem>>, vector<32x32xbf16>
    %18 = vector.extract_strided_slice %17 {offsets = [0, 0], sizes = [8, 32], strides = [1, 1]} : vector<32x32xbf16> to vector<8x32xbf16>
    %19 = vector.extract_strided_slice %17 {offsets = [8, 0], sizes = [8, 32], strides = [1, 1]} : vector<32x32xbf16> to vector<8x32xbf16>
    %20 = vector.extract_strided_slice %17 {offsets = [16, 0], sizes = [8, 32], strides = [1, 1]} : vector<32x32xbf16> to vector<8x32xbf16>
    %21 = vector.extract_strided_slice %17 {offsets = [24, 0], sizes = [8, 32], strides = [1, 1]} : vector<32x32xbf16> to vector<8x32xbf16>
    %cst_7 = arith.constant 0.000000e+00 : f32
    %22 = vector.broadcast %cst_7 : f32 to vector<8x32xf32>
    %23 = vector.extract_strided_slice %12 {offsets = [0, 0], sizes = [8, 8], strides = [1, 1]} : vector<16x32xbf16> to vector<8x8xbf16>
    %24 = vector.extract_strided_slice %14 {offsets = [0, 0], sizes = [8, 8], strides = [1, 1]} : vector<16x32xbf16> to vector<8x8xbf16>
    %25 = vector.extract_strided_slice %16 {offsets = [0, 0], sizes = [8, 8], strides = [1, 1]} : vector<16x32xbf16> to vector<8x8xbf16>
    %cst_8 = arith.constant dense<0.000000e+00> : vector<8x8xf32>
    %26 = tpu.matmul %23, %24, %cst_8 {dimension_numbers = #tpu.dot_dimension_numbers<[1], [1], [0], [0], [0, 0, 1, 0], [], []>} : vector<8x8xbf16>, vector<8x8xbf16>, vector<8x8xf32> -> vector<8x8xf32>
    %cst_9 = arith.constant dense<0xFF800000> : vector<8xf32>
    %27 = vector.multi_reduction <maximumf>, %26, %cst_9 [1] : vector<8x8xf32> to vector<8xf32>
    %28 = vector.shape_cast %27 : vector<8xf32> to vector<8x1xf32>
    %29 = vector.broadcast %28 : vector<8x1xf32> to vector<8x8xf32>
    %30 = arith.subf %26, %29 : vector<8x8xf32>
    %31 = math.exp %30 : vector<8x8xf32>
    %cst_10 = arith.constant dense<0.000000e+00> : vector<8xf32>
    %32 = vector.multi_reduction <add>, %31, %cst_10 [1] : vector<8x8xf32> to vector<8xf32>
    %33 = vector.shape_cast %32 : vector<8xf32> to vector<8x1xf32>
    %34 = tpu.reciprocal %33 : vector<8x1xf32> -> vector<8x1xf32>
    %35 = vector.broadcast %34 : vector<8x1xf32> to vector<8x8xf32>
    %36 = arith.mulf %31, %35 : vector<8x8xf32>
    %37 = arith.truncf %36 : vector<8x8xf32> to vector<8x8xbf16>
    %cst_11 = arith.constant dense<0.000000e+00> : vector<8x8xf32>
    %38 = tpu.matmul %37, %25, %cst_11 {dimension_numbers = #tpu.dot_dimension_numbers<[1], [0], [0], [1], [0, 0, 1, 1], [], []>} : vector<8x8xbf16>, vector<8x8xbf16>, vector<8x8xf32> -> vector<8x8xf32>
    %39 = arith.truncf %38 : vector<8x8xf32> to vector<8x8xbf16>
    %cst_12 = arith.constant dense<0.000000e+00> : vector<8x32xf32>
    %40 = tpu.matmul %39, %18, %cst_12 {dimension_numbers = #tpu.dot_dimension_numbers<[1], [0], [0], [1], [0, 0, 1, 1], [], []>} : vector<8x8xbf16>, vector<8x32xbf16>, vector<8x32xf32> -> vector<8x32xf32>
    %41 = arith.addf %22, %40 : vector<8x32xf32>
    %42 = vector.extract_strided_slice %12 {offsets = [0, 8], sizes = [8, 8], strides = [1, 1]} : vector<16x32xbf16> to vector<8x8xbf16>
    %43 = vector.extract_strided_slice %14 {offsets = [0, 8], sizes = [8, 8], strides = [1, 1]} : vector<16x32xbf16> to vector<8x8xbf16>
    %44 = vector.extract_strided_slice %16 {offsets = [0, 8], sizes = [8, 8], strides = [1, 1]} : vector<16x32xbf16> to vector<8x8xbf16>
    %cst_13 = arith.constant dense<0.000000e+00> : vector<8x8xf32>
    %45 = tpu.matmul %42, %43, %cst_13 {dimension_numbers = #tpu.dot_dimension_numbers<[1], [1], [0], [0], [0, 0, 1, 0], [], []>} : vector<8x8xbf16>, vector<8x8xbf16>, vector<8x8xf32> -> vector<8x8xf32>
    %cst_14 = arith.constant dense<0xFF800000> : vector<8xf32>
    %46 = vector.multi_reduction <maximumf>, %45, %cst_14 [1] : vector<8x8xf32> to vector<8xf32>
    %47 = vector.shape_cast %46 : vector<8xf32> to vector<8x1xf32>
    %48 = vector.broadcast %47 : vector<8x1xf32> to vector<8x8xf32>
    %49 = arith.subf %45, %48 : vector<8x8xf32>
    %50 = math.exp %49 : vector<8x8xf32>
    %cst_15 = arith.constant dense<0.000000e+00> : vector<8xf32>
    %51 = vector.multi_reduction <add>, %50, %cst_15 [1] : vector<8x8xf32> to vector<8xf32>
    %52 = vector.shape_cast %51 : vector<8xf32> to vector<8x1xf32>
    %53 = tpu.reciprocal %52 : vector<8x1xf32> -> vector<8x1xf32>
    %54 = vector.broadcast %53 : vector<8x1xf32> to vector<8x8xf32>
    %55 = arith.mulf %50, %54 : vector<8x8xf32>
    %56 = arith.truncf %55 : vector<8x8xf32> to vector<8x8xbf16>
    %cst_16 = arith.constant dense<0.000000e+00> : vector<8x8xf32>
    %57 = tpu.matmul %56, %44, %cst_16 {dimension_numbers = #tpu.dot_dimension_numbers<[1], [0], [0], [1], [0, 0, 1, 1], [], []>} : vector<8x8xbf16>, vector<8x8xbf16>, vector<8x8xf32> -> vector<8x8xf32>
    %58 = arith.truncf %57 : vector<8x8xf32> to vector<8x8xbf16>
    %cst_17 = arith.constant dense<0.000000e+00> : vector<8x32xf32>
    %59 = tpu.matmul %58, %19, %cst_17 {dimension_numbers = #tpu.dot_dimension_numbers<[1], [0], [0], [1], [0, 0, 1, 1], [], []>} : vector<8x8xbf16>, vector<8x32xbf16>, vector<8x32xf32> -> vector<8x32xf32>
    %60 = arith.addf %41, %59 : vector<8x32xf32>
    %61 = vector.extract_strided_slice %12 {offsets = [0, 16], sizes = [8, 8], strides = [1, 1]} : vector<16x32xbf16> to vector<8x8xbf16>
    %62 = vector.extract_strided_slice %14 {offsets = [0, 16], sizes = [8, 8], strides = [1, 1]} : vector<16x32xbf16> to vector<8x8xbf16>
    %63 = vector.extract_strided_slice %16 {offsets = [0, 16], sizes = [8, 8], strides = [1, 1]} : vector<16x32xbf16> to vector<8x8xbf16>
    %cst_18 = arith.constant dense<0.000000e+00> : vector<8x8xf32>
    %64 = tpu.matmul %61, %62, %cst_18 {dimension_numbers = #tpu.dot_dimension_numbers<[1], [1], [0], [0], [0, 0, 1, 0], [], []>} : vector<8x8xbf16>, vector<8x8xbf16>, vector<8x8xf32> -> vector<8x8xf32>
    %cst_19 = arith.constant dense<0xFF800000> : vector<8xf32>
    %65 = vector.multi_reduction <maximumf>, %64, %cst_19 [1] : vector<8x8xf32> to vector<8xf32>
    %66 = vector.shape_cast %65 : vector<8xf32> to vector<8x1xf32>
    %67 = vector.broadcast %66 : vector<8x1xf32> to vector<8x8xf32>
    %68 = arith.subf %64, %67 : vector<8x8xf32>
    %69 = math.exp %68 : vector<8x8xf32>
    %cst_20 = arith.constant dense<0.000000e+00> : vector<8xf32>
    %70 = vector.multi_reduction <add>, %69, %cst_20 [1] : vector<8x8xf32> to vector<8xf32>
    %71 = vector.shape_cast %70 : vector<8xf32> to vector<8x1xf32>
    %72 = tpu.reciprocal %71 : vector<8x1xf32> -> vector<8x1xf32>
    %73 = vector.broadcast %72 : vector<8x1xf32> to vector<8x8xf32>
    %74 = arith.mulf %69, %73 : vector<8x8xf32>
    %75 = arith.truncf %74 : vector<8x8xf32> to vector<8x8xbf16>
    %cst_21 = arith.constant dense<0.000000e+00> : vector<8x8xf32>
    %76 = tpu.matmul %75, %63, %cst_21 {dimension_numbers = #tpu.dot_dimension_numbers<[1], [0], [0], [1], [0, 0, 1, 1], [], []>} : vector<8x8xbf16>, vector<8x8xbf16>, vector<8x8xf32> -> vector<8x8xf32>
    %77 = arith.truncf %76 : vector<8x8xf32> to vector<8x8xbf16>
    %cst_22 = arith.constant dense<0.000000e+00> : vector<8x32xf32>
    %78 = tpu.matmul %77, %20, %cst_22 {dimension_numbers = #tpu.dot_dimension_numbers<[1], [0], [0], [1], [0, 0, 1, 1], [], []>} : vector<8x8xbf16>, vector<8x32xbf16>, vector<8x32xf32> -> vector<8x32xf32>
    %79 = arith.addf %60, %78 : vector<8x32xf32>
    %80 = vector.extract_strided_slice %12 {offsets = [0, 24], sizes = [8, 8], strides = [1, 1]} : vector<16x32xbf16> to vector<8x8xbf16>
    %81 = vector.extract_strided_slice %14 {offsets = [0, 24], sizes = [8, 8], strides = [1, 1]} : vector<16x32xbf16> to vector<8x8xbf16>
    %82 = vector.extract_strided_slice %16 {offsets = [0, 24], sizes = [8, 8], strides = [1, 1]} : vector<16x32xbf16> to vector<8x8xbf16>
    %cst_23 = arith.constant dense<0.000000e+00> : vector<8x8xf32>
    %83 = tpu.matmul %80, %81, %cst_23 {dimension_numbers = #tpu.dot_dimension_numbers<[1], [1], [0], [0], [0, 0, 1, 0], [], []>} : vector<8x8xbf16>, vector<8x8xbf16>, vector<8x8xf32> -> vector<8x8xf32>
    %cst_24 = arith.constant dense<0xFF800000> : vector<8xf32>
    %84 = vector.multi_reduction <maximumf>, %83, %cst_24 [1] : vector<8x8xf32> to vector<8xf32>
    %85 = vector.shape_cast %84 : vector<8xf32> to vector<8x1xf32>
    %86 = vector.broadcast %85 : vector<8x1xf32> to vector<8x8xf32>
    %87 = arith.subf %83, %86 : vector<8x8xf32>
    %88 = math.exp %87 : vector<8x8xf32>
    %cst_25 = arith.constant dense<0.000000e+00> : vector<8xf32>
    %89 = vector.multi_reduction <add>, %88, %cst_25 [1] : vector<8x8xf32> to vector<8xf32>
    %90 = vector.shape_cast %89 : vector<8xf32> to vector<8x1xf32>
    %91 = tpu.reciprocal %90 : vector<8x1xf32> -> vector<8x1xf32>
    %92 = vector.broadcast %91 : vector<8x1xf32> to vector<8x8xf32>
    %93 = arith.mulf %88, %92 : vector<8x8xf32>
    %94 = arith.truncf %93 : vector<8x8xf32> to vector<8x8xbf16>
    %cst_26 = arith.constant dense<0.000000e+00> : vector<8x8xf32>
    %95 = tpu.matmul %94, %82, %cst_26 {dimension_numbers = #tpu.dot_dimension_numbers<[1], [0], [0], [1], [0, 0, 1, 1], [], []>} : vector<8x8xbf16>, vector<8x8xbf16>, vector<8x8xf32> -> vector<8x8xf32>
    %96 = arith.truncf %95 : vector<8x8xf32> to vector<8x8xbf16>
    %cst_27 = arith.constant dense<0.000000e+00> : vector<8x32xf32>
    %97 = tpu.matmul %96, %21, %cst_27 {dimension_numbers = #tpu.dot_dimension_numbers<[1], [0], [0], [1], [0, 0, 1, 1], [], []>} : vector<8x8xbf16>, vector<8x32xbf16>, vector<8x32xf32> -> vector<8x32xf32>
    %98 = arith.addf %79, %97 : vector<8x32xf32>
    %cst_28 = arith.constant 0.000000e+00 : f32
    %99 = vector.broadcast %cst_28 : f32 to vector<8x32xf32>
    %100 = vector.extract_strided_slice %12 {offsets = [8, 0], sizes = [8, 8], strides = [1, 1]} : vector<16x32xbf16> to vector<8x8xbf16>
    %101 = vector.extract_strided_slice %14 {offsets = [8, 0], sizes = [8, 8], strides = [1, 1]} : vector<16x32xbf16> to vector<8x8xbf16>
    %102 = vector.extract_strided_slice %16 {offsets = [8, 0], sizes = [8, 8], strides = [1, 1]} : vector<16x32xbf16> to vector<8x8xbf16>
    %cst_29 = arith.constant dense<0.000000e+00> : vector<8x8xf32>
    %103 = tpu.matmul %100, %101, %cst_29 {dimension_numbers = #tpu.dot_dimension_numbers<[1], [1], [0], [0], [0, 0, 1, 0], [], []>} : vector<8x8xbf16>, vector<8x8xbf16>, vector<8x8xf32> -> vector<8x8xf32>
    %cst_30 = arith.constant dense<0xFF800000> : vector<8xf32>
    %104 = vector.multi_reduction <maximumf>, %103, %cst_30 [1] : vector<8x8xf32> to vector<8xf32>
    %105 = vector.shape_cast %104 : vector<8xf32> to vector<8x1xf32>
    %106 = vector.broadcast %105 : vector<8x1xf32> to vector<8x8xf32>
    %107 = arith.subf %103, %106 : vector<8x8xf32>
    %108 = math.exp %107 : vector<8x8xf32>
    %cst_31 = arith.constant dense<0.000000e+00> : vector<8xf32>
    %109 = vector.multi_reduction <add>, %108, %cst_31 [1] : vector<8x8xf32> to vector<8xf32>
    %110 = vector.shape_cast %109 : vector<8xf32> to vector<8x1xf32>
    %111 = tpu.reciprocal %110 : vector<8x1xf32> -> vector<8x1xf32>
    %112 = vector.broadcast %111 : vector<8x1xf32> to vector<8x8xf32>
    %113 = arith.mulf %108, %112 : vector<8x8xf32>
    %114 = arith.truncf %113 : vector<8x8xf32> to vector<8x8xbf16>
    %cst_32 = arith.constant dense<0.000000e+00> : vector<8x8xf32>
    %115 = tpu.matmul %114, %102, %cst_32 {dimension_numbers = #tpu.dot_dimension_numbers<[1], [0], [0], [1], [0, 0, 1, 1], [], []>} : vector<8x8xbf16>, vector<8x8xbf16>, vector<8x8xf32> -> vector<8x8xf32>
    %116 = arith.truncf %115 : vector<8x8xf32> to vector<8x8xbf16>
    %cst_33 = arith.constant dense<0.000000e+00> : vector<8x32xf32>
    %117 = tpu.matmul %116, %18, %cst_33 {dimension_numbers = #tpu.dot_dimension_numbers<[1], [0], [0], [1], [0, 0, 1, 1], [], []>} : vector<8x8xbf16>, vector<8x32xbf16>, vector<8x32xf32> -> vector<8x32xf32>
    %118 = arith.addf %99, %117 : vector<8x32xf32>
    %119 = vector.extract_strided_slice %12 {offsets = [8, 8], sizes = [8, 8], strides = [1, 1]} : vector<16x32xbf16> to vector<8x8xbf16>
    %120 = vector.extract_strided_slice %14 {offsets = [8, 8], sizes = [8, 8], strides = [1, 1]} : vector<16x32xbf16> to vector<8x8xbf16>
    %121 = vector.extract_strided_slice %16 {offsets = [8, 8], sizes = [8, 8], strides = [1, 1]} : vector<16x32xbf16> to vector<8x8xbf16>
    %cst_34 = arith.constant dense<0.000000e+00> : vector<8x8xf32>
    %122 = tpu.matmul %119, %120, %cst_34 {dimension_numbers = #tpu.dot_dimension_numbers<[1], [1], [0], [0], [0, 0, 1, 0], [], []>} : vector<8x8xbf16>, vector<8x8xbf16>, vector<8x8xf32> -> vector<8x8xf32>
    %cst_35 = arith.constant dense<0xFF800000> : vector<8xf32>
    %123 = vector.multi_reduction <maximumf>, %122, %cst_35 [1] : vector<8x8xf32> to vector<8xf32>
    %124 = vector.shape_cast %123 : vector<8xf32> to vector<8x1xf32>
    %125 = vector.broadcast %124 : vector<8x1xf32> to vector<8x8xf32>
    %126 = arith.subf %122, %125 : vector<8x8xf32>
    %127 = math.exp %126 : vector<8x8xf32>
    %cst_36 = arith.constant dense<0.000000e+00> : vector<8xf32>
    %128 = vector.multi_reduction <add>, %127, %cst_36 [1] : vector<8x8xf32> to vector<8xf32>
    %129 = vector.shape_cast %128 : vector<8xf32> to vector<8x1xf32>
    %130 = tpu.reciprocal %129 : vector<8x1xf32> -> vector<8x1xf32>
    %131 = vector.broadcast %130 : vector<8x1xf32> to vector<8x8xf32>
    %132 = arith.mulf %127, %131 : vector<8x8xf32>
    %133 = arith.truncf %132 : vector<8x8xf32> to vector<8x8xbf16>
    %cst_37 = arith.constant dense<0.000000e+00> : vector<8x8xf32>
    %134 = tpu.matmul %133, %121, %cst_37 {dimension_numbers = #tpu.dot_dimension_numbers<[1], [0], [0], [1], [0, 0, 1, 1], [], []>} : vector<8x8xbf16>, vector<8x8xbf16>, vector<8x8xf32> -> vector<8x8xf32>
    %135 = arith.truncf %134 : vector<8x8xf32> to vector<8x8xbf16>
    %cst_38 = arith.constant dense<0.000000e+00> : vector<8x32xf32>
    %136 = tpu.matmul %135, %19, %cst_38 {dimension_numbers = #tpu.dot_dimension_numbers<[1], [0], [0], [1], [0, 0, 1, 1], [], []>} : vector<8x8xbf16>, vector<8x32xbf16>, vector<8x32xf32> -> vector<8x32xf32>
    %137 = arith.addf %118, %136 : vector<8x32xf32>
    %138 = vector.extract_strided_slice %12 {offsets = [8, 16], sizes = [8, 8], strides = [1, 1]} : vector<16x32xbf16> to vector<8x8xbf16>
    %139 = vector.extract_strided_slice %14 {offsets = [8, 16], sizes = [8, 8], strides = [1, 1]} : vector<16x32xbf16> to vector<8x8xbf16>
    %140 = vector.extract_strided_slice %16 {offsets = [8, 16], sizes = [8, 8], strides = [1, 1]} : vector<16x32xbf16> to vector<8x8xbf16>
    %cst_39 = arith.constant dense<0.000000e+00> : vector<8x8xf32>
    %141 = tpu.matmul %138, %139, %cst_39 {dimension_numbers = #tpu.dot_dimension_numbers<[1], [1], [0], [0], [0, 0, 1, 0], [], []>} : vector<8x8xbf16>, vector<8x8xbf16>, vector<8x8xf32> -> vector<8x8xf32>
    %cst_40 = arith.constant dense<0xFF800000> : vector<8xf32>
    %142 = vector.multi_reduction <maximumf>, %141, %cst_40 [1] : vector<8x8xf32> to vector<8xf32>
    %143 = vector.shape_cast %142 : vector<8xf32> to vector<8x1xf32>
    %144 = vector.broadcast %143 : vector<8x1xf32> to vector<8x8xf32>
    %145 = arith.subf %141, %144 : vector<8x8xf32>
    %146 = math.exp %145 : vector<8x8xf32>
    %cst_41 = arith.constant dense<0.000000e+00> : vector<8xf32>
    %147 = vector.multi_reduction <add>, %146, %cst_41 [1] : vector<8x8xf32> to vector<8xf32>
    %148 = vector.shape_cast %147 : vector<8xf32> to vector<8x1xf32>
    %149 = tpu.reciprocal %148 : vector<8x1xf32> -> vector<8x1xf32>
    %150 = vector.broadcast %149 : vector<8x1xf32> to vector<8x8xf32>
    %151 = arith.mulf %146, %150 : vector<8x8xf32>
    %152 = arith.truncf %151 : vector<8x8xf32> to vector<8x8xbf16>
    %cst_42 = arith.constant dense<0.000000e+00> : vector<8x8xf32>
    %153 = tpu.matmul %152, %140, %cst_42 {dimension_numbers = #tpu.dot_dimension_numbers<[1], [0], [0], [1], [0, 0, 1, 1], [], []>} : vector<8x8xbf16>, vector<8x8xbf16>, vector<8x8xf32> -> vector<8x8xf32>
    %154 = arith.truncf %153 : vector<8x8xf32> to vector<8x8xbf16>
    %cst_43 = arith.constant dense<0.000000e+00> : vector<8x32xf32>
    %155 = tpu.matmul %154, %20, %cst_43 {dimension_numbers = #tpu.dot_dimension_numbers<[1], [0], [0], [1], [0, 0, 1, 1], [], []>} : vector<8x8xbf16>, vector<8x32xbf16>, vector<8x32xf32> -> vector<8x32xf32>
    %156 = arith.addf %137, %155 : vector<8x32xf32>
    %157 = vector.extract_strided_slice %12 {offsets = [8, 24], sizes = [8, 8], strides = [1, 1]} : vector<16x32xbf16> to vector<8x8xbf16>
    %158 = vector.extract_strided_slice %14 {offsets = [8, 24], sizes = [8, 8], strides = [1, 1]} : vector<16x32xbf16> to vector<8x8xbf16>
    %159 = vector.extract_strided_slice %16 {offsets = [8, 24], sizes = [8, 8], strides = [1, 1]} : vector<16x32xbf16> to vector<8x8xbf16>
    %cst_44 = arith.constant dense<0.000000e+00> : vector<8x8xf32>
    %160 = tpu.matmul %157, %158, %cst_44 {dimension_numbers = #tpu.dot_dimension_numbers<[1], [1], [0], [0], [0, 0, 1, 0], [], []>} : vector<8x8xbf16>, vector<8x8xbf16>, vector<8x8xf32> -> vector<8x8xf32>
    %cst_45 = arith.constant dense<0xFF800000> : vector<8xf32>
    %161 = vector.multi_reduction <maximumf>, %160, %cst_45 [1] : vector<8x8xf32> to vector<8xf32>
    %162 = vector.shape_cast %161 : vector<8xf32> to vector<8x1xf32>
    %163 = vector.broadcast %162 : vector<8x1xf32> to vector<8x8xf32>
    %164 = arith.subf %160, %163 : vector<8x8xf32>
    %165 = math.exp %164 : vector<8x8xf32>
    %cst_46 = arith.constant dense<0.000000e+00> : vector<8xf32>
    %166 = vector.multi_reduction <add>, %165, %cst_46 [1] : vector<8x8xf32> to vector<8xf32>
    %167 = vector.shape_cast %166 : vector<8xf32> to vector<8x1xf32>
    %168 = tpu.reciprocal %167 : vector<8x1xf32> -> vector<8x1xf32>
    %169 = vector.broadcast %168 : vector<8x1xf32> to vector<8x8xf32>
    %170 = arith.mulf %165, %169 : vector<8x8xf32>
    %171 = arith.truncf %170 : vector<8x8xf32> to vector<8x8xbf16>
    %cst_47 = arith.constant dense<0.000000e+00> : vector<8x8xf32>
    %172 = tpu.matmul %171, %159, %cst_47 {dimension_numbers = #tpu.dot_dimension_numbers<[1], [0], [0], [1], [0, 0, 1, 1], [], []>} : vector<8x8xbf16>, vector<8x8xbf16>, vector<8x8xf32> -> vector<8x8xf32>
    %173 = arith.truncf %172 : vector<8x8xf32> to vector<8x8xbf16>
    %cst_48 = arith.constant dense<0.000000e+00> : vector<8x32xf32>
    %174 = tpu.matmul %173, %21, %cst_48 {dimension_numbers = #tpu.dot_dimension_numbers<[1], [0], [0], [1], [0, 0, 1, 1], [], []>} : vector<8x8xbf16>, vector<8x32xbf16>, vector<8x32xf32> -> vector<8x32xf32>
    %175 = arith.addf %156, %174 : vector<8x32xf32>
    %176 = tpu.concatenate %98, %175 in 0 : vector<8x32xf32>, vector<8x32xf32> -> vector<16x32xf32>
    %177 = vector.broadcast %3 : vector<1x32xf32> to vector<16x32xf32>
    %178 = arith.addf %176, %177 : vector<16x32xf32>
    %179 = arith.addf %178, %0 : vector<16x32xf32>
    %cst_49 = arith.constant dense<0.000000e+00> : vector<16xf32>
    %180 = vector.multi_reduction <add>, %179, %cst_49 [1] : vector<16x32xf32> to vector<16xf32>
    %181 = vector.shape_cast %180 : vector<16xf32> to vector<16x1xf32>
    %cst_50 = arith.constant 3.200000e+01 : f32
    %182 = vector.broadcast %cst_50 : f32 to vector<16x1xf32>
    %183 = arith.divf %181, %182 : vector<16x1xf32>
    %184 = vector.broadcast %183 : vector<16x1xf32> to vector<16x32xf32>
    %185 = arith.subf %179, %184 : vector<16x32xf32>
    %186 = arith.mulf %185, %185 : vector<16x32xf32>
    %cst_51 = arith.constant dense<0.000000e+00> : vector<16xf32>
    %187 = vector.multi_reduction <add>, %186, %cst_51 [1] : vector<16x32xf32> to vector<16xf32>
    %188 = vector.shape_cast %187 : vector<16xf32> to vector<16x1xf32>
    %cst_52 = arith.constant 3.200000e+01 : f32
    %189 = vector.broadcast %cst_52 : f32 to vector<16x1xf32>
    %190 = arith.divf %188, %189 : vector<16x1xf32>
    %191 = vector.broadcast %183 : vector<16x1xf32> to vector<16x32xf32>
    %192 = arith.subf %179, %191 : vector<16x32xf32>
    %cst_53 = arith.constant 9.99999996E-13 : f32
    %193 = vector.broadcast %cst_53 : f32 to vector<16x1xf32>
    %194 = arith.addf %190, %193 : vector<16x1xf32>
    %195 = math.rsqrt %194 : vector<16x1xf32>
    %196 = vector.broadcast %195 : vector<16x1xf32> to vector<16x32xf32>
    %197 = arith.mulf %192, %196 : vector<16x32xf32>
    %198 = vector.broadcast %4 : vector<1x32xf32> to vector<16x32xf32>
    %199 = arith.mulf %197, %198 : vector<16x32xf32>
    %200 = vector.broadcast %5 : vector<1x32xf32> to vector<16x32xf32>
    %201 = arith.addf %199, %200 : vector<16x32xf32>
    %c0_54 = arith.constant 0 : index
    %c0_55 = arith.constant 0 : index
    %202 = vector.load %arg4[%c0_54, %c0_55] : memref<16x32xf32, #tpu.memory_space<vmem>>, vector<16x32xf32>
    tpu.vector_store %arg4[%c0_54, %c0_55], %201 {strides = array<i32>} : memref<16x32xf32, #tpu.memory_space<vmem>>, vector<16x32xf32>,
    return
  }
}

</mosaic_0001>

<llo_original>
// kernel: tpu_custom_call.1
$region0: #{tpu_custom_call.1}
  #allocation0 [shape = 'u32[]', space=smem, size = 0x4, offset = 0x4, fixed_abs, tag = 'smem constant byte address 0x4 - core index']
  #allocation1 [shape = 'u32[72,128]{1,0:T(1,128)}', space=vmem, size = 0x9000, scoped, tag = 'internal scratch']
  %s0 = inlined_call_operand.hbm [shape: f32[16,32], index: 0, kind: input, shape index: {}]
  %s1 = inlined_call_operand.hbm [shape: bf16[32,96], index: 1, kind: input, shape index: {}]
  %s2 = inlined_call_operand.hbm [shape: bf16[32,32], index: 2, kind: input, shape index: {}]
  %s3 = inlined_call_operand.hbm [shape: f32[4,128], index: 3, kind: input, shape index: {}]
  %s4 = inlined_call_operand.hbm [shape: f32[16,32], index: 4, kind: output, shape index: {}]
  %s5 = sld [smem:[#allocation0]]
  $region42: #{tpu_custom_call.1} parent=0
    _
  %s7 = ssub.s32 1, %s5
  %s8 = scalar_select 0, %s7, %s5
  $region1: #{tpu_custom_call.1} parent=0
    #allocation2 [shape = 'u8[8192]{0}', space=vmem, size = 0x2000, scoped, tag = 'input window, operand 0, single buffered']
    #allocation3 [shape = 's32[1]{0}', space=sflag, size = 0x4, scoped, tag = 'scoped memory for tpu_custom_call.1']
    #allocation4 [shape = 's32[1]{0}', space=sflag, size = 0x4, scoped, tag = 'scoped memory for tpu_custom_call.1']
    #allocation5 [shape = 'u8[8192]{0}', space=vmem, size = 0x2000, scoped, tag = 'input window, operand 1, single buffered']
    #allocation6 [shape = 's32[1]{0}', space=sflag, size = 0x4, scoped, tag = 'scoped memory for tpu_custom_call.1']
    #allocation7 [shape = 'u8[8192]{0}', space=vmem, size = 0x2000, scoped, tag = 'input window, operand 2, single buffered']
    #allocation8 [shape = 'u8[2048]{0}', space=vmem, size = 0x800, scoped, tag = 'input window, operand 3, single buffered']
    #allocation9 [shape = 's32[1]{0}', space=sflag, size = 0x4, scoped, tag = 'scoped memory for tpu_custom_call.1']
    #allocation10 [shape = 'u8[8192]{0}', space=vmem, size = 0x2000, scoped, tag = 'output window, operand 0, single buffered']
    %9 = vsyncpa [#allocation3], 0
    %10 = vsyncpa [#allocation6], 0
    %11 = vsyncpa [#allocation9], 0
    %12 = vsyncpa [#allocation4], 0
    // Predicated region
    $region2: #{tpu_custom_call.1} parent=1 // pred_check
      _
    $region3: #{tpu_custom_call.1} parent=1 // pred_check_branch
      %14 = sbr.rel (0) target = $region5
    $region4: #{tpu_custom_call.1} parent=1 // pred_region
      %16 = vsyncadd [#allocation3], 0
      %s17 = sshll.u32 %s0, 4
      %s18 = int_to_ptr.hbm [resolvable:$true] %s17
      %s19 = sshll.u32 [#allocation2], 4
      %s20 = int_to_ptr.vmem [resolvable:$true] %s19
      %25 = dma.hbm_to_vmem [thread:$0]  %s18, 256, %s20, [#allocation3], 128, 128, 8
    $region5: #{tpu_custom_call.1} parent=1 // pred_fallthru
      _
    // Predicated region
    $region6: #{tpu_custom_call.1} parent=1 // pred_check
      _
    $region7: #{tpu_custom_call.1} parent=1 // pred_check_branch
      %27 = sbr.rel (0) target = $region9
    $region8: #{tpu_custom_call.1} parent=1 // pred_region
      %29 = vsyncadd [#allocation6], 0
      %s30 = sshll.u32 %s1, 4
      %s31 = int_to_ptr.hbm [resolvable:$true] %s30
      %s32 = sshll.u32 [#allocation5], 4
      %s33 = int_to_ptr.vmem [resolvable:$true] %s32
      %38 = dma.hbm_to_vmem [thread:$0]  %s31, 256, %s33, [#allocation6], 64, 64, 4
    $region9: #{tpu_custom_call.1} parent=1 // pred_fallthru
      _
    // Predicated region
    $region10: #{tpu_custom_call.1} parent=1 // pred_check
      _
    $region11: #{tpu_custom_call.1} parent=1 // pred_check_branch
      %40 = sbr.rel (0) target = $region13
    $region12: #{tpu_custom_call.1} parent=1 // pred_region
      %42 = vsyncadd [#allocation6], 0
      %s43 = sshll.u32 %s2, 4
      %s44 = int_to_ptr.hbm [resolvable:$true] %s43
      %s45 = sshll.u32 [#allocation7], 4
      %s46 = int_to_ptr.vmem [resolvable:$true] %s45
      %51 = dma.hbm_to_vmem [thread:$0]  %s44, 256, %s46, [#allocation6], 64, 64, 4
    $region13: #{tpu_custom_call.1} parent=1 // pred_fallthru
      _
    // Predicated region
    $region14: #{tpu_custom_call.1} parent=1 // pred_check
      _
    $region15: #{tpu_custom_call.1} parent=1 // pred_check_branch
      %53 = sbr.rel (0) target = $region17
    $region16: #{tpu_custom_call.1} parent=1 // pred_region
      %55 = vsyncadd [#allocation9], 0
      %s57 = sshll.u32 %s3, 4
      %s58 = int_to_ptr.hbm [resolvable:$true] %s57
      %s59 = sshll.u32 [#allocation8], 4
      %s60 = int_to_ptr.vmem [resolvable:$true] %s59
      %62 = dma.hbm_to_vmem [thread:$0]  %s58, 64, %s60, [#allocation9]
    $region17: #{tpu_custom_call.1} parent=1 // pred_fallthru
      _
    // Predicated region
    $region18: #{tpu_custom_call.1} parent=1 // pred_check
      _
    $region19: #{tpu_custom_call.1} parent=1 // pred_check_branch
      %64 = sbr.rel (0) target = $region21
    $region20: #{tpu_custom_call.1} parent=1 // pred_region
      %66 = dma.done [#allocation3], 256
    $region21: #{tpu_custom_call.1} parent=1 // pred_fallthru
      _
    // Predicated region
    $region22: #{tpu_custom_call.1} parent=1 // pred_check
      _
    $region23: #{tpu_custom_call.1} parent=1 // pred_check_branch
      %68 = sbr.rel (0) target = $region25
    $region24: #{tpu_custom_call.1} parent=1 // pred_region
      %70 = dma.done [#allocation6], 256
    $region25: #{tpu_custom_call.1} parent=1 // pred_fallthru
      _
    // Predicated region
    $region26: #{tpu_custom_call.1} parent=1 // pred_check
      _
    $region27: #{tpu_custom_call.1} parent=1 // pred_check_branch
      %72 = sbr.rel (0) target = $region29
    $region28: #{tpu_custom_call.1} parent=1 // pred_region
      %74 = dma.done [#allocation6], 256
    $region29: #{tpu_custom_call.1} parent=1 // pred_fallthru
      _
    // Predicated region
    $region30: #{tpu_custom_call.1} parent=1 // pred_check
      _
    $region31: #{tpu_custom_call.1} parent=1 // pred_check_branch
      %76 = sbr.rel (0) target = $region33
    $region32: #{tpu_custom_call.1} parent=1 // pred_region
      %78 = dma.done [#allocation9], 64
    $region33: #{tpu_custom_call.1} parent=1 // pred_fallthru
      _
    %v80 = vld [vmem:[#allocation2] sm:$0xff]
    %v81 = vld [vmem:[#allocation2 + $0x8] sm:$0xff]
    %v82 = vld [vmem:[#allocation8] sm:$0xf]
    %v83 = vpack.c.bf16 %v81, %v80
    %v84 = vld [vmem:[#allocation5] sm:$0xf]
    %v85 = vld [vmem:[#allocation5 + $0x4] sm:$0xf]
    %v86 = vld [vmem:[#allocation5 + $0x8] sm:$0xf]
    %v87 = vld [vmem:[#allocation5 + $0xc] sm:$0xf]
    %v88 = vperm.slane %v82, 0
    %v93 = vunpack.c.l.b16 %v84
    %v94 = vunpack.c.l.b16 %v85
    %v95 = vunpack.c.l.b16 %v86
    %v96 = vunpack.c.l.b16 %v87
    %v97 = vpack.c.b16 %v94, %v93
    %v98 = vpack.c.b16 %v96, %v95
    %vm101 = vcmask 261120
    %v103 = vsel %vm101, %v83, 0
    %105 = vmatpush.bf16.msra.mxu0 0
    %106 = vmatpush.bf16.msra.mxu0 0
    %107 = vmatpush.bf16.msra.mxu0 0
    %108 = vmatpush.bf16.msra.mxu0 0
    %109 = vmatpush.bf16.msra.mxu0 0
    %110 = vmatpush.bf16.msra.mxu0 0
    %111 = vmatpush.bf16.msra.mxu0 %v98
    %112 = vmatpush.bf16.msra.mxu0 %v97
    %113 = vmatmul.bf16.gmra.mxu0 %v103
    %v114 = vpop.f32.mrf.mxu0
    %v115 = vadd.f32 %v88, %v114
    %v116 = vpop.f32.mrf.mxu0
    %v117 = vadd.f32 %v88, %v116
    %118 = vdwg.mxu0
    %v119 = vpack.c.bf16 %v115, %v115
    %v120 = vpack.c.bf16 %v117, %v117
    %v121 = vld [vmem:[#allocation7] sm:$0xf]
    %v122 = vld [vmem:[#allocation7 + $0x4] sm:$0xf]
    %v123 = vld [vmem:[#allocation7 + $0x8] sm:$0xf]
    %v124 = vld [vmem:[#allocation7 + $0xc] sm:$0xf]
    %v126 = vunpack.c.l.b16 %v119
    %v127 = vpack.c.b16 %v126, %v126
    %128 = vrot.lane.b32.xlu0 %v127, 96
    %v129 = vpop.permute.xlu0 %128
    %vm130 = vcmask 64512
    %v132 = vsel %vm130, %v119, 0
    %v135 = vsel %vm130, %v129, 0
    %137 = vmatpush.bf16.xpose.msra.mxu0 0
    %138 = vmatpush.bf16.xpose.msra.mxu0 0
    %139 = vmatpush.bf16.xpose.msra.mxu0 0
    %140 = vmatpush.bf16.xpose.msra.mxu0 0
    %141 = vmatpush.bf16.xpose.msra.mxu0 0
    %142 = vmatpush.bf16.xpose.msra.mxu0 0
    %143 = vmatpush.bf16.xpose.msra.mxu0 0
    %144 = vmatpush.bf16.xpose.msra.mxu0 %v135
    %145 = vmatmul.bf16.gmra.mxu0 %v132
    %v146 = vpop.f32.mrf.mxu0
    %v147 = vadd.f32 0.0, %v146
    %v148 = vpop.f32.mrf.mxu0
    %149 = vdwg.mxu0
    %v150 = vsel %vm130, %v147, -inf
    %151 = vmax.xlane.f32.xlu0 %v150
    %v152 = vpop.xlane.xlu0 %151
    %v153 = vsub.f32 %v147, %v152
    %v154 = vmul.f32 %v153, 1.442695
    %v155 = vpow.pop %v154
    %v156 = vsel %vm130, %v155, 0.0
    %157 = vadd.xlane.f32.xlu0 %v156
    %v158 = vpop.xlane.xlu0 %157
    %v159 = vrcp.pop %v158
    %v160 = vmul.f32 %v158, %v159
    %v161 = vsub.f32 1.0, %v160
    %v162 = vmul.f32 %v159, %v161
    %v163 = vadd.f32 %v159, %v162
    %vm164 = vweird.f32 %v158
    %vm165 = vweird.f32 %v159
    %vm166 = vmor %vm164, %vm165
    %v167 = vsel %vm166, %v159, %v163
    %v168 = vand.u32 2147483647, %v158
    %vm169 = vcmp.eq.f32.partialorder %v168, 8.507059e+37
    %v170 = vand.u32 %v158, 2147483648
    %v171 = vor.u32 1.1754944e-38, %v170
    %v172 = vsel %vm169, %v171, %v167
    %v173 = vmul.f32 %v155, %v172
    %v174 = vpack.c.bf16 %v173, %v173
    %175 = vrot.lane.b32.xlu0 %v127, 64
    %v176 = vpop.permute.xlu0 %175
    %v178 = vsel %vm130, %v174, 0
    %vm180 = vcmask 1043456
    %v182 = vsel %vm180, %v176, 0
    %184 = vmatpush.bf16.msra.mxu0 0
    %185 = vmatpush.bf16.msra.mxu0 0
    %186 = vmatpush.bf16.msra.mxu0 0
    %187 = vmatpush.bf16.msra.mxu0 0
    %188 = vmatpush.bf16.msra.mxu0 0
    %189 = vmatpush.bf16.msra.mxu0 0
    %190 = vmatpush.bf16.msra.mxu0 0
    %191 = vmatpush.bf16.msra.mxu0 %v182
    %192 = vmatmul.bf16.gmra.mxu0 %v178
    %v193 = vpop.f32.mrf.mxu0
    %v194 = vadd.f32 0.0, %v193
    %v195 = vpop.f32.mrf.mxu0
    %196 = vdwg.mxu0
    %v197 = vpack.c.bf16 %v194, %v194
    %198 = vrot.lane.b32.xlu0 %v127, 120
    %v199 = vpop.permute.xlu0 %198
    %200 = vrot.lane.b32.xlu0 %v127, 88
    %v201 = vpop.permute.xlu0 %200
    %v203 = vsel %vm130, %v199, 0
    %v206 = vsel %vm130, %v201, 0
    %208 = vmatpush.bf16.xpose.msra.mxu0 0
    %209 = vmatpush.bf16.xpose.msra.mxu0 0
    %210 = vmatpush.bf16.xpose.msra.mxu0 0
    %211 = vmatpush.bf16.xpose.msra.mxu0 0
    %212 = vmatpush.bf16.xpose.msra.mxu0 0
    %213 = vmatpush.bf16.xpose.msra.mxu0 0
    %214 = vmatpush.bf16.xpose.msra.mxu0 0
    %215 = vmatpush.bf16.xpose.msra.mxu0 %v206
    %216 = vmatmul.bf16.gmra.mxu0 %v203
    %v217 = vpop.f32.mrf.mxu0
    %v218 = vadd.f32 0.0, %v217
    %v219 = vpop.f32.mrf.mxu0
    %220 = vdwg.mxu0
    %v221 = vsel %vm130, %v218, -inf
    %222 = vmax.xlane.f32.xlu0 %v221
    %v223 = vpop.xlane.xlu0 %222
    %v224 = vsub.f32 %v218, %v223
    %v225 = vmul.f32 %v224, 1.442695
    %v226 = vpow.pop %v225
    %v227 = vsel %vm130, %v226, 0.0
    %228 = vadd.xlane.f32.xlu0 %v227
    %v229 = vpop.xlane.xlu0 %228
    %v230 = vrcp.pop %v229
    %v231 = vmul.f32 %v229, %v230
    %v232 = vsub.f32 1.0, %v231
    %v233 = vmul.f32 %v230, %v232
    %v234 = vadd.f32 %v230, %v233
    %vm235 = vweird.f32 %v229
    %vm236 = vweird.f32 %v230
    %vm237 = vmor %vm235, %vm236
    %v238 = vsel %vm237, %v230, %v234
    %v239 = vand.u32 2147483647, %v229
    %vm240 = vcmp.eq.f32.partialorder %v239, 8.507059e+37
    %v241 = vand.u32 %v229, 2147483648
    %v242 = vor.u32 1.1754944e-38, %v241
    %v243 = vsel %vm240, %v242, %v238
    %v244 = vmul.f32 %v226, %v243
    %v245 = vpack.c.bf16 %v244, %v244
    %246 = vrot.lane.b32.xlu0 %v127, 56
    %v247 = vpop.permute.xlu0 %246
    %v249 = vsel %vm130, %v245, 0
    %v252 = vsel %vm180, %v247, 0
    %254 = vmatpush.bf16.msra.mxu0 0
    %255 = vmatpush.bf16.msra.mxu0 0
    %256 = vmatpush.bf16.msra.mxu0 0
    %257 = vmatpush.bf16.msra.mxu0 0
    %258 = vmatpush.bf16.msra.mxu0 0
    %259 = vmatpush.bf16.msra.mxu0 0
    %260 = vmatpush.bf16.msra.mxu0 0
    %261 = vmatpush.bf16.msra.mxu0 %v252
    %262 = vmatmul.bf16.gmra.mxu0 %v249
    %v263 = vpop.f32.mrf.mxu0
    %v264 = vadd.f32 0.0, %v263
    %v265 = vpop.f32.mrf.mxu0
    %266 = vdwg.mxu0
    %v267 = vpack.c.bf16 %v264, %v264
    %v269 = vsel %vm130, %v267, 0
    %v272 = vsel %vm180, %v122, 0
    %274 = vmatpush.bf16.msra.mxu0 0
    %275 = vmatpush.bf16.msra.mxu0 0
    %276 = vmatpush.bf16.msra.mxu0 0
    %277 = vmatpush.bf16.msra.mxu0 0
    %278 = vmatpush.bf16.msra.mxu0 0
    %279 = vmatpush.bf16.msra.mxu0 0
    %280 = vmatpush.bf16.msra.mxu0 0
    %281 = vmatpush.bf16.msra.mxu0 %v272
    %282 = vmatmul.bf16.gmra.mxu0 %v269
    %v283 = vpop.f32.mrf.mxu0
    %v284 = vadd.f32 0.0, %v283
    %v285 = vpop.f32.mrf.mxu0
    %286 = vdwg.mxu0
    %v288 = vsel %vm130, %v197, 0
    %v291 = vsel %vm180, %v121, 0
    %293 = vmatpush.bf16.msra.mxu0 0
    %294 = vmatpush.bf16.msra.mxu0 0
    %295 = vmatpush.bf16.msra.mxu0 0
    %296 = vmatpush.bf16.msra.mxu0 0
    %297 = vmatpush.bf16.msra.mxu0 0
    %298 = vmatpush.bf16.msra.mxu0 0
    %299 = vmatpush.bf16.msra.mxu0 0
    %300 = vmatpush.bf16.msra.mxu0 %v291
    %301 = vmatmul.bf16.gmra.mxu0 %v288
    %v302 = vpop.f32.mrf.mxu0
    %v303 = vadd.f32 %v284, %v302
    %v304 = vpop.f32.mrf.mxu0
    %305 = vdwg.mxu0
    %306 = vrot.lane.b32.xlu0 %v127, 112
    %v307 = vpop.permute.xlu0 %306
    %308 = vrot.lane.b32.xlu0 %v127, 80
    %v309 = vpop.permute.xlu0 %308
    %v311 = vsel %vm130, %v307, 0
    %v314 = vsel %vm130, %v309, 0
    %316 = vmatpush.bf16.xpose.msra.mxu0 0
    %317 = vmatpush.bf16.xpose.msra.mxu0 0
    %318 = vmatpush.bf16.xpose.msra.mxu0 0
    %319 = vmatpush.bf16.xpose.msra.mxu0 0
    %320 = vmatpush.bf16.xpose.msra.mxu0 0
    %321 = vmatpush.bf16.xpose.msra.mxu0 0
    %322 = vmatpush.bf16.xpose.msra.mxu0 0
    %323 = vmatpush.bf16.xpose.msra.mxu0 %v314
    %324 = vmatmul.bf16.gmra.mxu0 %v311
    %v325 = vpop.f32.mrf.mxu0
    %v326 = vadd.f32 0.0, %v325
    %v327 = vpop.f32.mrf.mxu0
    %328 = vdwg.mxu0
    %v329 = vsel %vm130, %v326, -inf
    %330 = vmax.xlane.f32.xlu0 %v329
    %v331 = vpop.xlane.xlu0 %330
    %v332 = vsub.f32 %v326, %v331
    %v333 = vmul.f32 %v332, 1.442695
    %v334 = vpow.pop %v333
    %v335 = vsel %vm130, %v334, 0.0
    %336 = vadd.xlane.f32.xlu0 %v335
    %v337 = vpop.xlane.xlu0 %336
    %v338 = vrcp.pop %v337
    %v339 = vmul.f32 %v337, %v338
    %v340 = vsub.f32 1.0, %v339
    %v341 = vmul.f32 %v338, %v340
    %v342 = vadd.f32 %v338, %v341
    %vm343 = vweird.f32 %v337
    %vm344 = vweird.f32 %v338
    %vm345 = vmor %vm343, %vm344
    %v346 = vsel %vm345, %v338, %v342
    %v347 = vand.u32 2147483647, %v337
    %vm348 = vcmp.eq.f32.partialorder %v347, 8.507059e+37
    %v349 = vand.u32 %v337, 2147483648
    %v350 = vor.u32 1.1754944e-38, %v349
    %v351 = vsel %vm348, %v350, %v346
    %v352 = vmul.f32 %v334, %v351
    %v353 = vpack.c.bf16 %v352, %v352
    %354 = vrot.lane.b32.xlu0 %v127, 48
    %v355 = vpop.permute.xlu0 %354
    %v357 = vsel %vm130, %v353, 0
    %v360 = vsel %vm180, %v355, 0
    %362 = vmatpush.bf16.msra.mxu0 0
    %363 = vmatpush.bf16.msra.mxu0 0
    %364 = vmatpush.bf16.msra.mxu0 0
    %365 = vmatpush.bf16.msra.mxu0 0
    %366 = vmatpush.bf16.msra.mxu0 0
    %367 = vmatpush.bf16.msra.mxu0 0
    %368 = vmatpush.bf16.msra.mxu0 0
    %369 = vmatpush.bf16.msra.mxu0 %v360
    %370 = vmatmul.bf16.gmra.mxu0 %v357
    %v371 = vpop.f32.mrf.mxu0
    %v372 = vadd.f32 0.0, %v371
    %v373 = vpop.f32.mrf.mxu0
    %374 = vdwg.mxu0
    %v375 = vpack.c.bf16 %v372, %v372
    %v377 = vsel %vm130, %v375, 0
    %v380 = vsel %vm180, %v123, 0
    %382 = vmatpush.bf16.msra.mxu0 0
    %383 = vmatpush.bf16.msra.mxu0 0
    %384 = vmatpush.bf16.msra.mxu0 0
    %385 = vmatpush.bf16.msra.mxu0 0
    %386 = vmatpush.bf16.msra.mxu0 0
    %387 = vmatpush.bf16.msra.mxu0 0
    %388 = vmatpush.bf16.msra.mxu0 0
    %389 = vmatpush.bf16.msra.mxu0 %v380
    %390 = vmatmul.bf16.gmra.mxu0 %v377
    %v391 = vpop.f32.mrf.mxu0
    %v392 = vadd.f32 0.0, %v391
    %v393 = vpop.f32.mrf.mxu0
    %394 = vdwg.mxu0
    %v395 = vadd.f32 %v303, %v392
    %396 = vrot.lane.b32.xlu0 %v127, 104
    %v397 = vpop.permute.xlu0 %396
    %398 = vrot.lane.b32.xlu0 %v127, 72
    %v399 = vpop.permute.xlu0 %398
    %v401 = vsel %vm130, %v397, 0
    %v404 = vsel %vm130, %v399, 0
    %406 = vmatpush.bf16.xpose.msra.mxu0 0
    %407 = vmatpush.bf16.xpose.msra.mxu0 0
    %408 = vmatpush.bf16.xpose.msra.mxu0 0
    %409 = vmatpush.bf16.xpose.msra.mxu0 0
    %410 = vmatpush.bf16.xpose.msra.mxu0 0
    %411 = vmatpush.bf16.xpose.msra.mxu0 0
    %412 = vmatpush.bf16.xpose.msra.mxu0 0
    %413 = vmatpush.bf16.xpose.msra.mxu0 %v404
    %414 = vmatmul.bf16.gmra.mxu0 %v401
    %v415 = vpop.f32.mrf.mxu0
    %v416 = vadd.f32 0.0, %v415
    %v417 = vpop.f32.mrf.mxu0
    %418 = vdwg.mxu0
    %v419 = vsel %vm130, %v416, -inf
    %420 = vmax.xlane.f32.xlu0 %v419
    %v421 = vpop.xlane.xlu0 %420
    %v422 = vsub.f32 %v416, %v421
    %v423 = vmul.f32 %v422, 1.442695
    %v424 = vpow.pop %v423
    %v425 = vsel %vm130, %v424, 0.0
    %426 = vadd.xlane.f32.xlu0 %v425
    %v427 = vpop.xlane.xlu0 %426
    %v428 = vrcp.pop %v427
    %v429 = vmul.f32 %v427, %v428
    %v430 = vsub.f32 1.0, %v429
    %v431 = vmul.f32 %v428, %v430
    %v432 = vadd.f32 %v428, %v431
    %vm433 = vweird.f32 %v427
    %vm434 = vweird.f32 %v428
    %vm435 = vmor %vm433, %vm434
    %v436 = vsel %vm435, %v428, %v432
    %v437 = vand.u32 2147483647, %v427
    %vm438 = vcmp.eq.f32.partialorder %v437, 8.507059e+37
    %v439 = vand.u32 %v427, 2147483648
    %v440 = vor.u32 1.1754944e-38, %v439
    %v441 = vsel %vm438, %v440, %v436
    %v442 = vmul.f32 %v424, %v441
    %v443 = vpack.c.bf16 %v442, %v442
    %444 = vrot.lane.b32.xlu0 %v127, 40
    %v445 = vpop.permute.xlu0 %444
    %v447 = vsel %vm130, %v443, 0
    %v450 = vsel %vm180, %v445, 0
    %452 = vmatpush.bf16.msra.mxu0 0
    %453 = vmatpush.bf16.msra.mxu0 0
    %454 = vmatpush.bf16.msra.mxu0 0
    %455 = vmatpush.bf16.msra.mxu0 0
    %456 = vmatpush.bf16.msra.mxu0 0
    %457 = vmatpush.bf16.msra.mxu0 0
    %458 = vmatpush.bf16.msra.mxu0 0
    %459 = vmatpush.bf16.msra.mxu0 %v450
    %460 = vmatmul.bf16.gmra.mxu0 %v447
    %v461 = vpop.f32.mrf.mxu0
    %v462 = vadd.f32 0.0, %v461
    %v463 = vpop.f32.mrf.mxu0
    %464 = vdwg.mxu0
    %v465 = vpack.c.bf16 %v462, %v462
    %v467 = vsel %vm130, %v465, 0
    %v470 = vsel %vm180, %v124, 0
    %472 = vmatpush.bf16.msra.mxu0 0
    %473 = vmatpush.bf16.msra.mxu0 0
    %474 = vmatpush.bf16.msra.mxu0 0
    %475 = vmatpush.bf16.msra.mxu0 0
    %476 = vmatpush.bf16.msra.mxu0 0
    %477 = vmatpush.bf16.msra.mxu0 0
    %478 = vmatpush.bf16.msra.mxu0 0
    %479 = vmatpush.bf16.msra.mxu0 %v470
    %480 = vmatmul.bf16.gmra.mxu0 %v467
    %v481 = vpop.f32.mrf.mxu0
    %v482 = vadd.f32 0.0, %v481
    %v483 = vpop.f32.mrf.mxu0
    %484 = vdwg.mxu0
    %v485 = vadd.f32 %v395, %v482
    %v487 = vunpack.c.l.b16 %v120
    %v488 = vpack.c.b16 %v487, %v487
    %489 = vrot.lane.b32.xlu0 %v488, 96
    %v490 = vpop.permute.xlu0 %489
    %v492 = vsel %vm130, %v120, 0
    %v495 = vsel %vm130, %v490, 0
    %497 = vmatpush.bf16.xpose.msra.mxu0 0
    %498 = vmatpush.bf16.xpose.msra.mxu0 0
    %499 = vmatpush.bf16.xpose.msra.mxu0 0
    %500 = vmatpush.bf16.xpose.msra.mxu0 0
    %501 = vmatpush.bf16.xpose.msra.mxu0 0
    %502 = vmatpush.bf16.xpose.msra.mxu0 0
    %503 = vmatpush.bf16.xpose.msra.mxu0 0
    %504 = vmatpush.bf16.xpose.msra.mxu0 %v495
    %505 = vmatmul.bf16.gmra.mxu0 %v492
    %v506 = vpop.f32.mrf.mxu0
    %v507 = vadd.f32 0.0, %v506
    %v508 = vpop.f32.mrf.mxu0
    %509 = vdwg.mxu0
    %v510 = vsel %vm130, %v507, -inf
    %511 = vmax.xlane.f32.xlu0 %v510
    %v512 = vpop.xlane.xlu0 %511
    %v513 = vsub.f32 %v507, %v512
    %v514 = vmul.f32 %v513, 1.442695
    %v515 = vpow.pop %v514
    %v516 = vsel %vm130, %v515, 0.0
    %517 = vadd.xlane.f32.xlu0 %v516
    %v518 = vpop.xlane.xlu0 %517
    %v519 = vrcp.pop %v518
    %v520 = vmul.f32 %v518, %v519
    %v521 = vsub.f32 1.0, %v520
    %v522 = vmul.f32 %v519, %v521
    %v523 = vadd.f32 %v519, %v522
    %vm524 = vweird.f32 %v518
    %vm525 = vweird.f32 %v519
    %vm526 = vmor %vm524, %vm525
    %v527 = vsel %vm526, %v519, %v523
    %v528 = vand.u32 2147483647, %v518
    %vm529 = vcmp.eq.f32.partialorder %v528, 8.507059e+37
    %v530 = vand.u32 %v518, 2147483648
    %v531 = vor.u32 1.1754944e-38, %v530
    %v532 = vsel %vm529, %v531, %v527
    %v533 = vmul.f32 %v515, %v532
    %v534 = vpack.c.bf16 %v533, %v533
    %535 = vrot.lane.b32.xlu0 %v488, 64
    %v536 = vpop.permute.xlu0 %535
    %v538 = vsel %vm130, %v534, 0
    %v541 = vsel %vm180, %v536, 0
    %543 = vmatpush.bf16.msra.mxu0 0
    %544 = vmatpush.bf16.msra.mxu0 0
    %545 = vmatpush.bf16.msra.mxu0 0
    %546 = vmatpush.bf16.msra.mxu0 0
    %547 = vmatpush.bf16.msra.mxu0 0
    %548 = vmatpush.bf16.msra.mxu0 0
    %549 = vmatpush.bf16.msra.mxu0 0
    %550 = vmatpush.bf16.msra.mxu0 %v541
    %551 = vmatmul.bf16.gmra.mxu0 %v538
    %v552 = vpop.f32.mrf.mxu0
    %v553 = vadd.f32 0.0, %v552
    %v554 = vpop.f32.mrf.mxu0
    %555 = vdwg.mxu0
    %v556 = vpack.c.bf16 %v553, %v553
    %557 = vrot.lane.b32.xlu0 %v488, 120
    %v558 = vpop.permute.xlu0 %557
    %559 = vrot.lane.b32.xlu0 %v488, 88
    %v560 = vpop.permute.xlu0 %559
    %v562 = vsel %vm130, %v558, 0
    %v565 = vsel %vm130, %v560, 0
    %567 = vmatpush.bf16.xpose.msra.mxu0 0
    %568 = vmatpush.bf16.xpose.msra.mxu0 0
    %569 = vmatpush.bf16.xpose.msra.mxu0 0
    %570 = vmatpush.bf16.xpose.msra.mxu0 0
    %571 = vmatpush.bf16.xpose.msra.mxu0 0
    %572 = vmatpush.bf16.xpose.msra.mxu0 0
    %573 = vmatpush.bf16.xpose.msra.mxu0 0
    %574 = vmatpush.bf16.xpose.msra.mxu0 %v565
    %575 = vmatmul.bf16.gmra.mxu0 %v562
    %v576 = vpop.f32.mrf.mxu0
    %v577 = vadd.f32 0.0, %v576
    %v578 = vpop.f32.mrf.mxu0
    %579 = vdwg.mxu0
    %v580 = vsel %vm130, %v577, -inf
    %581 = vmax.xlane.f32.xlu0 %v580
    %v582 = vpop.xlane.xlu0 %581
    %v583 = vsub.f32 %v577, %v582
    %v584 = vmul.f32 %v583, 1.442695
    %v585 = vpow.pop %v584
    %v586 = vsel %vm130, %v585, 0.0
    %587 = vadd.xlane.f32.xlu0 %v586
    %v588 = vpop.xlane.xlu0 %587
    %v589 = vrcp.pop %v588
    %v590 = vmul.f32 %v588, %v589
    %v591 = vsub.f32 1.0, %v590
    %v592 = vmul.f32 %v589, %v591
    %v593 = vadd.f32 %v589, %v592
    %vm594 = vweird.f32 %v588
    %vm595 = vweird.f32 %v589
    %vm596 = vmor %vm594, %vm595
    %v597 = vsel %vm596, %v589, %v593
    %v598 = vand.u32 2147483647, %v588
    %vm599 = vcmp.eq.f32.partialorder %v598, 8.507059e+37
    %v600 = vand.u32 %v588, 2147483648
    %v601 = vor.u32 1.1754944e-38, %v600
    %v602 = vsel %vm599, %v601, %v597
    %v603 = vmul.f32 %v585, %v602
    %v604 = vpack.c.bf16 %v603, %v603
    %605 = vrot.lane.b32.xlu0 %v488, 56
    %v606 = vpop.permute.xlu0 %605
    %v608 = vsel %vm130, %v604, 0
    %v611 = vsel %vm180, %v606, 0
    %613 = vmatpush.bf16.msra.mxu0 0
    %614 = vmatpush.bf16.msra.mxu0 0
    %615 = vmatpush.bf16.msra.mxu0 0
    %616 = vmatpush.bf16.msra.mxu0 0
    %617 = vmatpush.bf16.msra.mxu0 0
    %618 = vmatpush.bf16.msra.mxu0 0
    %619 = vmatpush.bf16.msra.mxu0 0
    %620 = vmatpush.bf16.msra.mxu0 %v611
    %621 = vmatmul.bf16.gmra.mxu0 %v608
    %v622 = vpop.f32.mrf.mxu0
    %v623 = vadd.f32 0.0, %v622
    %v624 = vpop.f32.mrf.mxu0
    %625 = vdwg.mxu0
    %v626 = vpack.c.bf16 %v623, %v623
    %v628 = vsel %vm130, %v626, 0
    %630 = vmatpush.bf16.msra.mxu0 0
    %631 = vmatpush.bf16.msra.mxu0 0
    %632 = vmatpush.bf16.msra.mxu0 0
    %633 = vmatpush.bf16.msra.mxu0 0
    %634 = vmatpush.bf16.msra.mxu0 0
    %635 = vmatpush.bf16.msra.mxu0 0
    %636 = vmatpush.bf16.msra.mxu0 0
    %637 = vmatpush.bf16.msra.mxu0 %v272
    %638 = vmatmul.bf16.gmra.mxu0 %v628
    %v639 = vpop.f32.mrf.mxu0
    %v640 = vadd.f32 0.0, %v639
    %v641 = vpop.f32.mrf.mxu0
    %642 = vdwg.mxu0
    %v644 = vsel %vm130, %v556, 0
    %646 = vmatpush.bf16.msra.mxu0 0
    %647 = vmatpush.bf16.msra.mxu0 0
    %648 = vmatpush.bf16.msra.mxu0 0
    %649 = vmatpush.bf16.msra.mxu0 0
    %650 = vmatpush.bf16.msra.mxu0 0
    %651 = vmatpush.bf16.msra.mxu0 0
    %652 = vmatpush.bf16.msra.mxu0 0
    %653 = vmatpush.bf16.msra.mxu0 %v291
    %654 = vmatmul.bf16.gmra.mxu0 %v644
    %v655 = vpop.f32.mrf.mxu0
    %v656 = vadd.f32 %v640, %v655
    %v657 = vpop.f32.mrf.mxu0
    %658 = vdwg.mxu0
    %659 = vrot.lane.b32.xlu0 %v488, 112
    %v660 = vpop.permute.xlu0 %659
    %661 = vrot.lane.b32.xlu0 %v488, 80
    %v662 = vpop.permute.xlu0 %661
    %v664 = vsel %vm130, %v660, 0
    %v667 = vsel %vm130, %v662, 0
    %669 = vmatpush.bf16.xpose.msra.mxu0 0
    %670 = vmatpush.bf16.xpose.msra.mxu0 0
    %671 = vmatpush.bf16.xpose.msra.mxu0 0
    %672 = vmatpush.bf16.xpose.msra.mxu0 0
    %673 = vmatpush.bf16.xpose.msra.mxu0 0
    %674 = vmatpush.bf16.xpose.msra.mxu0 0
    %675 = vmatpush.bf16.xpose.msra.mxu0 0
    %676 = vmatpush.bf16.xpose.msra.mxu0 %v667
    %677 = vmatmul.bf16.gmra.mxu0 %v664
    %v678 = vpop.f32.mrf.mxu0
    %v679 = vadd.f32 0.0, %v678
    %v680 = vpop.f32.mrf.mxu0
    %681 = vdwg.mxu0
    %v682 = vsel %vm130, %v679, -inf
    %683 = vmax.xlane.f32.xlu0 %v682
    %v684 = vpop.xlane.xlu0 %683
    %v685 = vsub.f32 %v679, %v684
    %v686 = vmul.f32 %v685, 1.442695
    %v687 = vpow.pop %v686
    %v688 = vsel %vm130, %v687, 0.0
    %689 = vadd.xlane.f32.xlu0 %v688
    %v690 = vpop.xlane.xlu0 %689
    %v691 = vrcp.pop %v690
    %v692 = vmul.f32 %v690, %v691
    %v693 = vsub.f32 1.0, %v692
    %v694 = vmul.f32 %v691, %v693
    %v695 = vadd.f32 %v691, %v694
    %vm696 = vweird.f32 %v690
    %vm697 = vweird.f32 %v691
    %vm698 = vmor %vm696, %vm697
    %v699 = vsel %vm698, %v691, %v695
    %v700 = vand.u32 2147483647, %v690
    %vm701 = vcmp.eq.f32.partialorder %v700, 8.507059e+37
    %v702 = vand.u32 %v690, 2147483648
    %v703 = vor.u32 1.1754944e-38, %v702
    %v704 = vsel %vm701, %v703, %v699
    %v705 = vmul.f32 %v687, %v704
    %v706 = vpack.c.bf16 %v705, %v705
    %707 = vrot.lane.b32.xlu0 %v488, 48
    %v708 = vpop.permute.xlu0 %707
    %v710 = vsel %vm130, %v706, 0
    %v713 = vsel %vm180, %v708, 0
    %715 = vmatpush.bf16.msra.mxu0 0
    %716 = vmatpush.bf16.msra.mxu0 0
    %717 = vmatpush.bf16.msra.mxu0 0
    %718 = vmatpush.bf16.msra.mxu0 0
    %719 = vmatpush.bf16.msra.mxu0 0
    %720 = vmatpush.bf16.msra.mxu0 0
    %721 = vmatpush.bf16.msra.mxu0 0
    %722 = vmatpush.bf16.msra.mxu0 %v713
    %723 = vmatmul.bf16.gmra.mxu0 %v710
    %v724 = vpop.f32.mrf.mxu0
    %v725 = vadd.f32 0.0, %v724
    %v726 = vpop.f32.mrf.mxu0
    %727 = vdwg.mxu0
    %v728 = vpack.c.bf16 %v725, %v725
    %v730 = vsel %vm130, %v728, 0
    %732 = vmatpush.bf16.msra.mxu0 0
    %733 = vmatpush.bf16.msra.mxu0 0
    %734 = vmatpush.bf16.msra.mxu0 0
    %735 = vmatpush.bf16.msra.mxu0 0
    %736 = vmatpush.bf16.msra.mxu0 0
    %737 = vmatpush.bf16.msra.mxu0 0
    %738 = vmatpush.bf16.msra.mxu0 0
    %739 = vmatpush.bf16.msra.mxu0 %v380
    %740 = vmatmul.bf16.gmra.mxu0 %v730
    %v741 = vpop.f32.mrf.mxu0
    %v742 = vadd.f32 0.0, %v741
    %v743 = vpop.f32.mrf.mxu0
    %744 = vdwg.mxu0
    %v745 = vadd.f32 %v656, %v742
    %746 = vrot.lane.b32.xlu0 %v488, 104
    %v747 = vpop.permute.xlu0 %746
    %748 = vrot.lane.b32.xlu0 %v488, 72
    %v749 = vpop.permute.xlu0 %748
    %v751 = vsel %vm130, %v747, 0
    %v754 = vsel %vm130, %v749, 0
    %756 = vmatpush.bf16.xpose.msra.mxu0 0
    %757 = vmatpush.bf16.xpose.msra.mxu0 0
    %758 = vmatpush.bf16.xpose.msra.mxu0 0
    %759 = vmatpush.bf16.xpose.msra.mxu0 0
    %760 = vmatpush.bf16.xpose.msra.mxu0 0
    %761 = vmatpush.bf16.xpose.msra.mxu0 0
    %762 = vmatpush.bf16.xpose.msra.mxu0 0
    %763 = vmatpush.bf16.xpose.msra.mxu0 %v754
    %764 = vmatmul.bf16.gmra.mxu0 %v751
    %v765 = vpop.f32.mrf.mxu0
    %v766 = vadd.f32 0.0, %v765
    %v767 = vpop.f32.mrf.mxu0
    %768 = vdwg.mxu0
    %v769 = vsel %vm130, %v766, -inf
    %770 = vmax.xlane.f32.xlu0 %v769
    %v771 = vpop.xlane.xlu0 %770
    %v772 = vsub.f32 %v766, %v771
    %v773 = vmul.f32 %v772, 1.442695
    %v774 = vpow.pop %v773
    %v775 = vsel %vm130, %v774, 0.0
    %776 = vadd.xlane.f32.xlu0 %v775
    %v777 = vpop.xlane.xlu0 %776
    %v778 = vrcp.pop %v777
    %v779 = vmul.f32 %v777, %v778
    %v780 = vsub.f32 1.0, %v779
    %v781 = vmul.f32 %v778, %v780
    %v782 = vadd.f32 %v778, %v781
    %vm783 = vweird.f32 %v777
    %vm784 = vweird.f32 %v778
    %vm785 = vmor %vm783, %vm784
    %v786 = vsel %vm785, %v778, %v782
    %v787 = vand.u32 2147483647, %v777
    %vm788 = vcmp.eq.f32.partialorder %v787, 8.507059e+37
    %v789 = vand.u32 %v777, 2147483648
    %v790 = vor.u32 1.1754944e-38, %v789
    %v791 = vsel %vm788, %v790, %v786
    %v792 = vmul.f32 %v774, %v791
    %v793 = vpack.c.bf16 %v792, %v792
    %794 = vrot.lane.b32.xlu0 %v488, 40
    %v795 = vpop.permute.xlu0 %794
    %v797 = vsel %vm130, %v793, 0
    %v800 = vsel %vm180, %v795, 0
    %802 = vmatpush.bf16.msra.mxu0 0
    %803 = vmatpush.bf16.msra.mxu0 0
    %804 = vmatpush.bf16.msra.mxu0 0
    %805 = vmatpush.bf16.msra.mxu0 0
    %806 = vmatpush.bf16.msra.mxu0 0
    %807 = vmatpush.bf16.msra.mxu0 0
    %808 = vmatpush.bf16.msra.mxu0 0
    %809 = vmatpush.bf16.msra.mxu0 %v800
    %810 = vmatmul.bf16.gmra.mxu0 %v797
    %v811 = vpop.f32.mrf.mxu0
    %v812 = vadd.f32 0.0, %v811
    %v813 = vpop.f32.mrf.mxu0
    %814 = vdwg.mxu0
    %v815 = vpack.c.bf16 %v812, %v812
    %v817 = vsel %vm130, %v815, 0
    %819 = vmatpush.bf16.msra.mxu0 0
    %820 = vmatpush.bf16.msra.mxu0 0
    %821 = vmatpush.bf16.msra.mxu0 0
    %822 = vmatpush.bf16.msra.mxu0 0
    %823 = vmatpush.bf16.msra.mxu0 0
    %824 = vmatpush.bf16.msra.mxu0 0
    %825 = vmatpush.bf16.msra.mxu0 0
    %826 = vmatpush.bf16.msra.mxu0 %v470
    %827 = vmatmul.bf16.gmra.mxu0 %v817
    %v828 = vpop.f32.mrf.mxu0
    %v829 = vadd.f32 0.0, %v828
    %v830 = vpop.f32.mrf.mxu0
    %831 = vdwg.mxu0
    %v832 = vadd.f32 %v745, %v829
    %v833 = vperm.slane %v82, 1
    %v834 = vadd.f32 %v485, %v833
    %v835 = vadd.f32 %v832, %v833
    %v836 = vadd.f32 %v834, %v80
    %v837 = vadd.f32 %v835, %v81
    %v838 = vsel %vm101, %v836, 0.0
    %839 = vadd.xlane.f32.xlu0 %v838
    %v840 = vpop.xlane.xlu0 %839
    %v841 = vsel %vm101, %v837, 0.0
    %842 = vadd.xlane.f32.xlu0 %v841
    %v843 = vpop.xlane.xlu0 %842
    %v844 = vrcp.pop 32.0
    %v845 = vmul.f32 32.0, %v844
    %v846 = vsub.f32 1.0, %v845
    %v847 = vmul.f32 %v844, %v846
    %v848 = vadd.f32 %v844, %v847
    %vm849 = vweird.f32 %v844
    %v850 = vsel %vm849, %v844, %v848
    %v851 = vmul.f32 %v840, %v850
    %v852 = vmul.f32 %v843, %v850
    %v853 = vsub.f32 %v836, %v851
    %v854 = vsub.f32 %v837, %v852
    %v855 = vmul.f32 %v853, %v853
    %v856 = vmul.f32 %v854, %v854
    %v857 = vsel %vm101, %v855, 0.0
    %858 = vadd.xlane.f32.xlu0 %v857
    %v859 = vpop.xlane.xlu0 %858
    %v860 = vsel %vm101, %v856, 0.0
    %861 = vadd.xlane.f32.xlu0 %v860
    %v862 = vpop.xlane.xlu0 %861
    %v863 = vmul.f32 %v859, %v850
    %v864 = vmul.f32 %v862, %v850
    %v865 = vadd.f32 %v863, 1e-12
    %v866 = vadd.f32 %v864, 1e-12
    %v867 = vrsqrt.pop %v865
    %v868 = vmul.f32 %v867, %v865
    %v869 = vmul.f32 %v868, %v867
    %v870 = vmul.f32 0.5, %v869
    %v871 = vsub.f32 1.5, %v870
    %v872 = vmul.f32 %v867, %v871
    %vm873 = vweird.f32 %v865
    %vm874 = vweird.f32 %v867
    %vm875 = vmor %vm873, %vm874
    %v876 = vsel %vm875, %v867, %v872
    %v877 = vrsqrt.pop %v866
    %v878 = vmul.f32 %v877, %v866
    %v879 = vmul.f32 %v878, %v877
    %v880 = vmul.f32 0.5, %v879
    %v881 = vsub.f32 1.5, %v880
    %v882 = vmul.f32 %v877, %v881
    %vm883 = vweird.f32 %v866
    %vm884 = vweird.f32 %v877
    %vm885 = vmor %vm883, %vm884
    %v886 = vsel %vm885, %v877, %v882
    %v887 = vmul.f32 %v853, %v876
    %v888 = vmul.f32 %v854, %v886
    %v889 = vperm.slane %v82, 2
    %v890 = vmul.f32 %v887, %v889
    %v891 = vmul.f32 %v888, %v889
    %v892 = vperm.slane %v82, 3
    %v893 = vadd.f32 %v890, %v892
    %v894 = vadd.f32 %v891, %v892
    %895 = vst.msk [vmem:[#allocation10] sm:$0xff] %vm101, %v893
    %896 = vst.msk [vmem:[#allocation10 + $0x8] sm:$0xff] %vm101, %v894
    // Predicated region
    $region34: #{tpu_custom_call.1} parent=1 // pred_check
      _
    $region35: #{tpu_custom_call.1} parent=1 // pred_check_branch
      %898 = sbr.rel (0) target = $region37
    $region36: #{tpu_custom_call.1} parent=1 // pred_region
      %900 = vsyncadd [#allocation4], 0
      %s901 = sshll.u32 [#allocation10], 4
      %s902 = int_to_ptr.vmem [resolvable:$true] %s901
      %s903 = sshll.u32 %s4, 4
      %s904 = int_to_ptr.hbm [resolvable:$true] %s903
      %909 = dma.vmem_to_hbm [thread:$0]  %s902, 256, %s904, [#allocation4], 128, 128, 8
    $region37: #{tpu_custom_call.1} parent=1 // pred_fallthru
      _
    // Predicated region
    $region38: #{tpu_custom_call.1} parent=1 // pred_check
      _
    $region39: #{tpu_custom_call.1} parent=1 // pred_check_branch
      %911 = sbr.rel (0) target = $region41
    $region40: #{tpu_custom_call.1} parent=1 // pred_region
      %913 = dma.done [#allocation4], 256
    $region41: #{tpu_custom_call.1} parent=1 // pred_fallthru
      _
    %914 = vsyncpa [#allocation3], 1
    %915 = vsyncpa [#allocation6], 1
    %916 = vsyncpa [#allocation9], 1
    %917 = vsyncpa [#allocation4], 1

</llo_original>
